<compile_context>
chip_gen: v7x
topology: tpu7x:2x2x1
jax: 0.10.0
libtpu: 0.0.40
codegen_flags: <defaults>
</compile_context>

<pallas_src>
import functools

import jax
import jax.numpy as jnp
from jax.experimental import pallas as pl
from jax.experimental.pallas import tpu as pltpu


# --------------------------------------------------------------------------
# TPU-generation detection (Python-level, baked into the kernel variant).
# --------------------------------------------------------------------------
def _device_kind():
    try:
        return jax.devices()[0].device_kind.lower()
    except Exception:  # pragma: no cover - CPU/interpret fallbacks
        return ""


_KIND = _device_kind()
_IS_V5E = ("v5 lite" in _KIND) or ("v5e" in _KIND) or ("v5litepod" in _KIND)
_IS_PRE_V6 = _IS_V5E or ("v4" in _KIND) or ("v3" in _KIND) or ("v2" in _KIND)
# bf16 VPU/EUP only exist on v6e/v7x; keep the f32 activation path on v5e.
_ACT_DTYPE = jnp.float32 if _IS_PRE_V6 else jnp.bfloat16
# v5e/v6e have 128 MiB physical VMEM (v5e default scoped is only 16 MiB);
# v7x has only 64 MiB physical, so stay conservative unless we positively
# detect an older generation.
_VMEM_LIMIT = (96 << 20) if (_IS_PRE_V6 or "v6" in _KIND) else (48 << 20)


# --------------------------------------------------------------------------
# Pallas kernel: fused per-pixel MLP (FiLM scale *and* shift pre-folded)
#   x_aug = [x ; 1]                                  # (C+1, T), ones row in VMEM
#   h     = W1_aug[b] @ x_aug                        # (hidden, T), shift included
#   h     = silu(h)                                  # bf16 on v6e/v7x, f32 on v5e
#   out   = W2^T @ h + b2                            # (C, T)
# Grid = (batch, spatial tiles), both "parallel".  Weights / folded FiLM
# params are tiny and stay resident across the (innermost) spatial axis;
# x/out tiles stream through VMEM, double-buffered by BlockSpec.
# --------------------------------------------------------------------------
def _film_mlp_kernel(x_ref, w1a_ref, w2t_ref, b2_ref, o_ref, *, act_dtype):
    x = x_ref[0]                                                   # (C, T) bf16
    t = x.shape[-1]
    # Constant ones row so the FiLM shift rides the MXU instead of the VPU.
    x_aug = jnp.concatenate([x, jnp.ones((1, t), x.dtype)], axis=0)  # (C+1, T)
    # Both dots should land on the MXU (f32 accumulation); K=C+1 and M=C are
    # small but MXU-legal — verify vmatmul in the bundle dump if tuning.
    h = jnp.dot(w1a_ref[0], x_aug,
                preferred_element_type=jnp.float32)                # (hidden, T)
    h = h.astype(act_dtype)
    # SiLU via tanh: silu(x) = x * (0.5*tanh(0.5*x) + 0.5)  -> 1 EUP push/elem.
    h = h * (jnp.tanh(h * 0.5) * 0.5 + 0.5)
    out = jnp.dot(w2t_ref[...], h.astype(jnp.bfloat16),
                  preferred_element_type=jnp.float32)              # (C, T)
    o_ref[0] = (out + b2_ref[...]).astype(o_ref.dtype)


def _pick_tile_hw(hw, min_tiles=4, max_tile=4096):
    """Largest 128-multiple tile that divides hw, capped at `max_tile` and
    preferring >= `min_tiles` tiles per image so the pipeline has depth and
    v7x's two TensorCores both get work.  `hw` must be a multiple of 128."""
    tile = min(hw, max_tile, max(128, (hw // min_tiles) // 128 * 128))
    tile = max(128, (tile // 128) * 128)
    while hw % tile:
        tile -= 128
    return tile


def film_mlp(x_bcs, w1_aug, w2t, b2, *, act_dtype=_ACT_DTYPE,
             out_dtype=jnp.bfloat16, vmem_limit_bytes=_VMEM_LIMIT):
    """x_bcs: (B, C, HW) bf16 (free reshape of the NCHW latent, HW % 128 == 0).
    w1_aug: (B, hidden, C+1) bf16 — FiLM-scaled W1^T with the folded shift as
    the last column.  w2t: (C, hidden) bf16.  b2: (C, 1) f32."""
    B, C, HW = x_bcs.shape
    hidden, c_aug = w1_aug.shape[1], w1_aug.shape[2]
    assert HW % 128 == 0
    tile = _pick_tile_hw(HW)

    kernel = functools.partial(_film_mlp_kernel, act_dtype=act_dtype)
    return pl.pallas_call(
        kernel,
        out_shape=jax.ShapeDtypeStruct((B, C, HW), out_dtype),
        grid_spec=pltpu.PrefetchScalarGridSpec(
            num_scalar_prefetch=0,
            grid=(B, HW // tile),                                   # spatial innermost
            in_specs=[
                pl.BlockSpec((1, C, tile), lambda b, s: (b, 0, s)),       # x tile
                pl.BlockSpec((1, hidden, c_aug), lambda b, s: (b, 0, 0)),  # W1_aug
                pl.BlockSpec((C, hidden), lambda b, s: (0, 0)),            # W2^T
                pl.BlockSpec((C, 1), lambda b, s: (0, 0)),                 # b2
            ],
            out_specs=pl.BlockSpec((1, C, tile), lambda b, s: (b, 0, s)),
        ),
        compiler_params=pltpu.CompilerParams(
            dimension_semantics=("parallel", "parallel"),
            vmem_limit_bytes=vmem_limit_bytes),
    )(x_bcs, w1_aug, w2t, b2)


# --------------------------------------------------------------------------
# Plain-JAX glue: timestep + text conditioning -> folded FiLM parameters
# --------------------------------------------------------------------------
def sinusoidal_embedding(t, dim):
    """t: (B,) -> (B, dim)."""
    half = dim // 2
    freqs = jnp.exp(-jnp.log(10000.0) * jnp.arange(half, dtype=jnp.float32) / half)
    args = t[:, None].astype(jnp.float32) * freqs[None, :]
    return jnp.concatenate([jnp.sin(args), jnp.cos(args)], axis=-1)


class PallasDiffusionModel:
    """Concrete DiffusionModel with its hot path (per-pixel FiLM MLP) in Pallas."""
    # TODO(synk): Component/.to() device & dtype plumbing from the PyTorch base
    # class has no Pallas equivalent; only the forward contract is implemented.

    def __init__(self, in_channels, hidden, text_dim, key):
        self.in_channels = self.out_channels = in_channels
        self.hidden = hidden
        self.act_dtype = _ACT_DTYPE
        self.vmem_limit = _VMEM_LIMIT
        ks = jax.random.split(key, 6)
        s_mlp, s_cond = 0.3, 0.15
        # per-pixel MLP (1x1 conv equivalent); w2 stored pre-transposed (C, hidden)
        self.w1 = (s_mlp * jax.random.normal(ks[0], (in_channels, hidden))).astype(jnp.float32)
        self.b1 = jnp.zeros((hidden,), jnp.float32)
        self.w2t = (s_mlp * jax.random.normal(ks[1], (in_channels, hidden))).astype(jnp.bfloat16)
        self.b2 = jnp.zeros((in_channels, 1), jnp.float32)
        # conditioning projections
        self.wt = (s_cond * jax.random.normal(ks[2], (hidden, hidden))).astype(jnp.float32)
        self.wtxt = (s_cond * jax.random.normal(ks[3], (text_dim, hidden))).astype(jnp.float32)
        self.wcond = (s_cond * jax.random.normal(ks[4], (hidden, 2 * hidden))).astype(jnp.float32)
        self.bcond = jnp.zeros((2 * hidden,), jnp.float32)

    def _film_params(self, timestep, text_embed):
        """Returns W1_aug (B, hidden, C+1) bf16 — FiLM-scaled W1^T with the
        folded shift as the last column — and the timestep embedding (aux)."""
        t_emb = sinusoidal_embedding(timestep, self.hidden)                 # (B, hidden)
        txt_pooled = jnp.mean(text_embed, axis=1)                           # (B, text_dim)
        cond = jax.nn.silu(t_emb @ self.wt + txt_pooled @ self.wtxt)        # (B, hidden)
        ss = cond @ self.wcond + self.bcond                                 # (B, 2*hidden)
        scale, shift = jnp.split(ss, 2, axis=-1)                            # (B, hidden) each
        gain = 1.0 + scale
        # (x@W1 + b1)*gain + shift == x @ (W1*gain) + (b1*gain + shift)
        w1_eff = gain[:, :, None] * self.w1.T[None, :, :]                   # (B, hidden, C)
        eff_shift = (self.b1[None, :] * gain + shift)[:, :, None]           # (B, hidden, 1)
        # NOTE(review): folding FiLM into bf16 weights diverges slightly from an
        # f32 baseline that applies FiLM after an f32 matmul; the in-script
        # reference replicates the same bf16 folding so the check is tight.
        w1_aug = jnp.concatenate([w1_eff, eff_shift], axis=-1).astype(jnp.bfloat16)
        return w1_aug, t_emb

    @functools.partial(jax.jit, static_argnums=0)
    def _forward_one(self, latent_nchw, timestep, text_embed):
        B, C, H, W = latent_nchw.shape
        w1_aug, t_emb = self._film_params(timestep, text_embed)
        hw = H * W
        pad = (-hw) % 128                       # pad HW instead of one giant block
        x = latent_nchw.reshape(B, C, hw).astype(jnp.bfloat16)   # bf16 stream, NCHW kept
        if pad:
            x = jnp.pad(x, ((0, 0), (0, 0), (0, pad)))
        out = film_mlp(x, w1_aug, self.w2t, self.b2,
                       act_dtype=self.act_dtype,
                       vmem_limit_bytes=self.vmem_limit)
        if pad:
            out = out[..., :hw]
        return out.reshape(B, C, H, W), t_emb

    def forward(self, latents, timestep, text_embeds, **kwargs):
        """latents: List[(B,C,H,W)], timestep: (B,), text_embeds: List[(B,T,D)]."""
        noises, t_embs = [], []
        for latent, text in zip(latents, text_embeds):
            n, te = self._forward_one(latent, timestep, text)
            noises.append(n)
            t_embs.append(te)
        aux = {"timestep_embedding": t_embs}
        return noises, aux


# --------------------------------------------------------------------------
if __name__ == "__main__":
    key = jax.random.PRNGKey(0)
    k_model, k_lat, k_txt, k_t = jax.random.split(key, 4)

    B, C, H, W = 2, 4, 16, 16
    T, TEXT_D, HIDDEN = 8, 32, 32

    model = PallasDiffusionModel(in_channels=C, hidden=HIDDEN, text_dim=TEXT_D,
                                 key=k_model)

    latents = [jax.random.normal(k_lat, (B, C, H, W), jnp.float32)]
    text_embeds = [jax.random.normal(k_txt, (B, T, TEXT_D), jnp.float32)]
    timestep = jax.random.randint(k_t, (B,), 0, 1000).astype(jnp.int32)

    noises, aux = model.forward(latents, timestep, text_embeds)
    jax.block_until_ready(noises[0])

    # Pure-JAX reference of the Pallas hot path (same bf16 folding / casts /
    # tanh-form SiLU / activation dtype as the kernel).
    x = latents[0].reshape(B, C, H * W).astype(jnp.bfloat16)
    x_aug = jnp.concatenate([x, jnp.ones((B, 1, H * W), jnp.bfloat16)], axis=1)
    w1_aug, _ = model._film_params(timestep, text_embeds[0])
    h = jnp.einsum('bhc,bct->bht', w1_aug, x_aug,
                   preferred_element_type=jnp.float32)
    h = h.astype(model.act_dtype)
    h = h * (jnp.tanh(h * 0.5) * 0.5 + 0.5)
    ref = jnp.einsum('ch,bht->bct', model.w2t, h.astype(jnp.bfloat16),
                     preferred_element_type=jnp.float32) + model.b2[None]
    ref = ref.astype(jnp.bfloat16).reshape(B, C, H, W)

    assert noises[0].shape == (B, C, H, W)
    assert noises[0].dtype == jnp.bfloat16
    # bf16 activations / bf16 output storage -> loosened tolerance vs f32 path.
    assert jnp.allclose(noises[0].astype(jnp.float32), ref.astype(jnp.float32),
                        atol=3e-2, rtol=5e-2), float(
        jnp.max(jnp.abs(noises[0].astype(jnp.float32) - ref.astype(jnp.float32))))

    print("KERNEL_OK")
</pallas_src>

<mosaic_0001>
module attributes {stable_mosaic.version = 11 : i64} {
  func.func @_film_mlp_kernel(%arg0: i32, %arg1: i32, %arg2: memref<1x4x128xbf16, #tpu.memory_space<vmem>>, %arg3: memref<1x32x5xbf16, #tpu.memory_space<vmem>>, %arg4: memref<4x32xbf16, #tpu.memory_space<vmem>>, %arg5: memref<4x1xf32, #tpu.memory_space<vmem>>, %arg6: memref<1x4x128xbf16, #tpu.memory_space<vmem>>) attributes {dimension_semantics = [#tpu.dimension_semantics<parallel>, #tpu.dimension_semantics<parallel>], iteration_bounds = array<i64: 2, 2>, scalar_prefetch = 0 : i64, scratch_operands = 0 : i64, tpu.core_type = #tpu.core_type<tc>, window_params = [{transform_indices = @transform_0, window_bounds = array<i64: 1, 4, 128>}, {transform_indices = @transform_1, window_bounds = array<i64: 1, 32, 5>}, {pipeline_mode = #tpu.pipeline_mode<synchronous>, transform_indices = @transform_2, window_bounds = array<i64: 4, 32>}, {pipeline_mode = #tpu.pipeline_mode<synchronous>, transform_indices = @transform_3, window_bounds = array<i64: 4, 1>}, {transform_indices = @transform_4, window_bounds = array<i64: 1, 4, 128>}]} {
    %c0 = arith.constant 0 : index
    %c0_0 = arith.constant 0 : index
    %c0_1 = arith.constant 0 : index
    %0 = vector.load %arg2[%c0, %c0_0, %c0_1] : memref<1x4x128xbf16, #tpu.memory_space<vmem>>, vector<1x4x128xbf16>
    %1 = vector.shape_cast %0 : vector<1x4x128xbf16> to vector<4x128xbf16>
    %cst = arith.constant 1.000000e+00 : bf16
    %2 = vector.broadcast %cst : bf16 to vector<1x128xbf16>
    %3 = tpu.concatenate %1, %2 in 0 : vector<4x128xbf16>, vector<1x128xbf16> -> vector<5x128xbf16>
    %c0_2 = arith.constant 0 : index
    %c0_3 = arith.constant 0 : index
    %c0_4 = arith.constant 0 : index
    %4 = vector.load %arg3[%c0_2, %c0_3, %c0_4] : memref<1x32x5xbf16, #tpu.memory_space<vmem>>, vector<1x32x5xbf16>
    %5 = vector.shape_cast %4 : vector<1x32x5xbf16> to vector<32x5xbf16>
    %cst_5 = arith.constant dense<0.000000e+00> : vector<32x128xf32>
    %6 = tpu.matmul %5, %3, %cst_5 {dimension_numbers = #tpu.dot_dimension_numbers<[1], [0], [0], [1], [0, 0, 1, 1], [], []>} : vector<32x5xbf16>, vector<5x128xbf16>, vector<32x128xf32> -> vector<32x128xf32>
    %7 = arith.truncf %6 : vector<32x128xf32> to vector<32x128xbf16>
    %cst_6 = arith.constant 5.000000e-01 : bf16
    %8 = vector.broadcast %cst_6 : bf16 to vector<32x128xbf16>
    %9 = arith.mulf %7, %8 : vector<32x128xbf16>
    %10 = math.tanh %9 : vector<32x128xbf16>
    %cst_7 = arith.constant 5.000000e-01 : bf16
    %11 = vector.broadcast %cst_7 : bf16 to vector<32x128xbf16>
    %12 = arith.mulf %10, %11 : vector<32x128xbf16>
    %cst_8 = arith.constant 5.000000e-01 : bf16
    %13 = vector.broadcast %cst_8 : bf16 to vector<32x128xbf16>
    %14 = arith.addf %12, %13 : vector<32x128xbf16>
    %15 = arith.mulf %7, %14 : vector<32x128xbf16>
    %c0_9 = arith.constant 0 : index
    %c0_10 = arith.constant 0 : index
    %16 = vector.load %arg4[%c0_9, %c0_10] : memref<4x32xbf16, #tpu.memory_space<vmem>>, vector<4x32xbf16>
    %cst_11 = arith.constant dense<0.000000e+00> : vector<4x128xf32>
    %17 = tpu.matmul %16, %15, %cst_11 {dimension_numbers = #tpu.dot_dimension_numbers<[1], [0], [0], [1], [0, 0, 1, 1], [], []>} : vector<4x32xbf16>, vector<32x128xbf16>, vector<4x128xf32> -> vector<4x128xf32>
    %c0_12 = arith.constant 0 : index
    %c0_13 = arith.constant 0 : index
    %18 = vector.load %arg5[%c0_12, %c0_13] : memref<4x1xf32, #tpu.memory_space<vmem>>, vector<4x1xf32>
    %19 = vector.broadcast %18 : vector<4x1xf32> to vector<4x128xf32>
    %20 = arith.addf %17, %19 : vector<4x128xf32>
    %21 = arith.truncf %20 : vector<4x128xf32> to vector<4x128xbf16>
    %c0_14 = arith.constant 0 : index
    %c0_15 = arith.constant 0 : index
    %c0_16 = arith.constant 0 : index
    %22 = vector.load %arg6[%c0_14, %c0_15, %c0_16] : memref<1x4x128xbf16, #tpu.memory_space<vmem>>, vector<1x4x128xbf16>
    %23 = vector.shape_cast %22 : vector<1x4x128xbf16> to vector<4x128xbf16>
    %24 = vector.shape_cast %21 : vector<4x128xbf16> to vector<1x4x128xbf16>
    tpu.vector_store %arg6[%c0_14, %c0_15, %c0_16], %24 {strides = array<i32>} : memref<1x4x128xbf16, #tpu.memory_space<vmem>>, vector<1x4x128xbf16>,
    return
  }
  func.func @transform_0(%arg0: i32, %arg1: i32) -> (i32, i32, i32) {
    %c0_i32 = arith.constant 0 : i32
    %c0_i32_0 = arith.constant 0 : i32
    return %arg0, %c0_i32, %arg1 : i32, i32, i32
  }
  func.func @transform_1(%arg0: i32, %arg1: i32) -> (i32, i32, i32) {
    %c0_i32 = arith.constant 0 : i32
    %c0_i32_0 = arith.constant 0 : i32
    %c0_i32_1 = arith.constant 0 : i32
    return %arg0, %c0_i32, %c0_i32_0 : i32, i32, i32
  }
  func.func @transform_2(%arg0: i32, %arg1: i32) -> (i32, i32) {
    %c0_i32 = arith.constant 0 : i32
    %c0_i32_0 = arith.constant 0 : i32
    %c0_i32_1 = arith.constant 0 : i32
    return %c0_i32, %c0_i32_0 : i32, i32
  }
  func.func @transform_3(%arg0: i32, %arg1: i32) -> (i32, i32) {
    %c0_i32 = arith.constant 0 : i32
    %c0_i32_0 = arith.constant 0 : i32
    %c0_i32_1 = arith.constant 0 : i32
    return %c0_i32, %c0_i32_0 : i32, i32
  }
  func.func @transform_4(%arg0: i32, %arg1: i32) -> (i32, i32, i32) {
    %c0_i32 = arith.constant 0 : i32
    %c0_i32_0 = arith.constant 0 : i32
    return %arg0, %c0_i32, %arg1 : i32, i32, i32
  }
}

</mosaic_0001>

<llo_original>
// kernel: _forward_one.1
$region0: #{_forward_one.1}
  #allocation0 [shape = 'u32[]', space=smem, size = 0x4, offset = 0x4, fixed_abs, tag = 'smem constant byte address 0x4 - core index']
  #allocation1 [shape = 'u32[144,128]{1,0:T(1,128)}', space=vmem, size = 0x12000, scoped, tag = 'internal scratch']
  %s0 = inlined_call_operand.vmem [shape: bf16[2,4,256], index: 0, kind: input, shape index: {}]
  %s1 = inlined_call_operand.vmem [shape: bf16[2,32,5], index: 1, kind: input, shape index: {}]
  %s2 = inlined_call_operand.vmem [shape: bf16[4,32], index: 2, kind: input, shape index: {}]
  %s3 = inlined_call_operand.vmem [shape: f32[4,1], index: 3, kind: input, shape index: {}]
  %s4 = inlined_call_operand.vmem [shape: bf16[2,4,256], index: 4, kind: output, shape index: {}]
  %s5 = sld [smem:[#allocation0]]
  $region49: #{_forward_one.1} parent=0
    _
  %s7 = ssub.s32 1, %s5
  %s8 = scalar_select 0, %s7, %s5
  loop: start=0, step=1, limit=6
  $region2: #{_forward_one.1} parent=0 // loop_pre_header
    _
  $region3: #{_forward_one.1} parent=0 // loop_header
    %s10 = sphi 0, %s14
    %p11 = scmp.ge.s32.totalorder %s10, 6
    %s17 = sphi 0, %s29
    %s18 = sphi 0, %s25
    %s19 = sphi 0, %s17
    %s20 = sphi 0, %s18
    %s21 = sphi 0, %s19
    %s22 = sphi 0, %s20
    %s34 = sphi 0, %s36
    %s37 = sphi 0, %s34
    %s38 = sphi 0, %s37
    %s54 = sphi 0, %s38
    %s60 = sphi 0, %s62
    %s63 = sphi 0, %s60
    %s64 = sphi 0, %s63
    %s80 = sphi 0, %s64
    %s84 = sphi 0, %s84
    %s86 = sphi 0, %s84
    %s87 = sphi 0, %s86
    %s101 = sphi 0, %s87
    %s105 = sphi 0, %s105
    %s107 = sphi 0, %s105
    %s108 = sphi 0, %s107
    %s122 = sphi 0, %s108
    %s130 = sphi 0, %s132
    %s133 = sphi 0, %s130
    %s134 = sphi 0, %s133
    %s150 = sphi 0, %s134
  $region4: #{_forward_one.1} parent=0 // loop_header_branch
    %13 = sbr.rel (%p11) target = $region8
  $region5: #{_forward_one.1} parent=0 // loop_body
    %s15 = ssub.s32 %s10, 1
    %s16 = ssub.s32 %s10, 2
    %s23 = sadd.s32 1, %s18
    %p24 = scmp.ge.s32.totalorder %s23, 2
    %s25 = scalar_select %p24, 0, %s23
    %s26 = sadd.s32 1, %s17
    %s27 = scalar_select %p24, %s26, %s17
    %p28 = scmp.ge.s32.totalorder %s27, 2
    %s29 = scalar_select %p28, 0, %s27
    %s30 = ssub.s32 %s17, %s29
    %s31 = ssub.s32 %s18, %s25
    %s32 = sor.u32 %s30, %s31
    %p33 = scmp.eq.s32.totalorder %s32, 0
    %s35 = sadd.s32 %s34, 1
    %s36 = scalar_select %p33, %s34, %s35
    %p39 = pneg %p33
    %p40 = scmp.eq.s32.totalorder %s10, 3
    %p41 = por %p39, %p40
    %p42 = scmp.ne.s32.totalorder %s34, %s37
    %p43 = scmp.eq.s32.totalorder %s10, 0
    %p44 = por %p42, %p43
    %p45 = scmp.ne.s32.totalorder %s34, %s37
    %p46 = scmp.eq.s32.totalorder %s15, 3
    %p47 = por %p45, %p46
    %p48 = scmp.ne.s32.totalorder %s37, %s38
    %p49 = scmp.eq.s32.totalorder %s15, 0
    %p50 = por %p48, %p49
    %p51 = scmp.ne.s32.totalorder %s37, %s38
    %p52 = scmp.eq.s32.totalorder %s16, 3
    %p53 = por %p51, %p52
    %p55 = scmp.ne.s32.totalorder %s38, %s54
    %p56 = scmp.eq.s32.totalorder %s16, 0
    %p57 = por %p55, %p56
    %s58 = ssub.s32 %s17, %s29
    %p59 = scmp.eq.s32.totalorder %s58, 0
    %s61 = sadd.s32 %s60, 1
    %s62 = scalar_select %p59, %s60, %s61
    %p65 = pneg %p59
    %p66 = scmp.eq.s32.totalorder %s10, 3
    %p67 = por %p65, %p66
    %p68 = scmp.ne.s32.totalorder %s60, %s63
    %p69 = scmp.eq.s32.totalorder %s10, 0
    %p70 = por %p68, %p69
    %p71 = scmp.ne.s32.totalorder %s60, %s63
    %p72 = scmp.eq.s32.totalorder %s15, 3
    %p73 = por %p71, %p72
    %p74 = scmp.ne.s32.totalorder %s63, %s64
    %p75 = scmp.eq.s32.totalorder %s15, 0
    %p76 = por %p74, %p75
    %p77 = scmp.ne.s32.totalorder %s63, %s64
    %p78 = scmp.eq.s32.totalorder %s16, 3
    %p79 = por %p77, %p78
    %p81 = scmp.ne.s32.totalorder %s64, %s80
    %p82 = scmp.eq.s32.totalorder %s16, 0
    %p83 = por %p81, %p82
    %s85 = sadd.s32 %s84, 1
    %p88 = scmp.eq.s32.totalorder %s10, 3
    %p89 = scmp.ne.s32.totalorder %s84, %s86
    %p90 = scmp.eq.s32.totalorder %s10, 0
    %p91 = por %p89, %p90
    %p92 = scmp.ne.s32.totalorder %s84, %s86
    %p93 = scmp.eq.s32.totalorder %s15, 3
    %p94 = por %p92, %p93
    %p95 = scmp.ne.s32.totalorder %s86, %s87
    %p96 = scmp.eq.s32.totalorder %s15, 0
    %p97 = por %p95, %p96
    %p98 = scmp.ne.s32.totalorder %s86, %s87
    %p99 = scmp.eq.s32.totalorder %s16, 3
    %p100 = por %p98, %p99
    %p102 = scmp.ne.s32.totalorder %s87, %s101
    %p103 = scmp.eq.s32.totalorder %s16, 0
    %p104 = por %p102, %p103
    %s106 = sadd.s32 %s105, 1
    %p109 = scmp.eq.s32.totalorder %s10, 3
    %p110 = scmp.ne.s32.totalorder %s105, %s107
    %p111 = scmp.eq.s32.totalorder %s10, 0
    %p112 = por %p110, %p111
    %p113 = scmp.ne.s32.totalorder %s105, %s107
    %p114 = scmp.eq.s32.totalorder %s15, 3
    %p115 = por %p113, %p114
    %p116 = scmp.ne.s32.totalorder %s107, %s108
    %p117 = scmp.eq.s32.totalorder %s15, 0
    %p118 = por %p116, %p117
    %p119 = scmp.ne.s32.totalorder %s107, %s108
    %p120 = scmp.eq.s32.totalorder %s16, 3
    %p121 = por %p119, %p120
    %p123 = scmp.ne.s32.totalorder %s108, %s122
    %p124 = scmp.eq.s32.totalorder %s16, 0
    %p125 = por %p123, %p124
    %s126 = ssub.s32 %s17, %s29
    %s127 = ssub.s32 %s18, %s25
    %s128 = sor.u32 %s126, %s127
    %p129 = scmp.eq.s32.totalorder %s128, 0
    %s131 = sadd.s32 %s130, 1
    %s132 = scalar_select %p129, %s130, %s131
    %p135 = pneg %p129
    %p136 = scmp.eq.s32.totalorder %s10, 3
    %p137 = por %p135, %p136
    %p138 = scmp.ne.s32.totalorder %s130, %s133
    %p139 = scmp.eq.s32.totalorder %s10, 0
    %p140 = por %p138, %p139
    %p141 = scmp.ne.s32.totalorder %s130, %s133
    %p142 = scmp.eq.s32.totalorder %s15, 3
    %p143 = por %p141, %p142
    %p144 = scmp.ne.s32.totalorder %s133, %s134
    %p145 = scmp.eq.s32.totalorder %s15, 0
    %p146 = por %p144, %p145
    %p147 = scmp.ne.s32.totalorder %s133, %s134
    %p148 = scmp.eq.s32.totalorder %s16, 3
    %p149 = por %p147, %p148
    %p151 = scmp.ne.s32.totalorder %s134, %s150
    %p152 = scmp.eq.s32.totalorder %s16, 0
    %p153 = por %p151, %p152
    %p154 = scmp.le.s32.totalorder 1, %s10
    %p155 = scmp.lt.s32.totalorder %s10, 5
    %p156 = pnand %p154, %p155
    %p157 = pneg %p156
    // Predicated region
    $region9: #{_forward_one.1} parent=5 // pred_check
      _
    $region10: #{_forward_one.1} parent=5 // pred_check_branch
      %159 = sbr.rel (%p156) target = $region12
    $region11: #{_forward_one.1} parent=5 // pred_region
      %s160 = ssub.s32 %s10, 1
      // Predicated region
      $region13: #{_forward_one.1} parent=11 // pred_check
        %p161 = pneg %p97
      $region14: #{_forward_one.1} parent=11 // pred_check_branch
        %163 = sbr.rel (%p161) target = $region16
      $region15: #{_forward_one.1} parent=11 // pred_region
        _
      $region16: #{_forward_one.1} parent=11 // pred_fallthru
        _
      // Predicated region
      $region17: #{_forward_one.1} parent=11 // pred_check
        %p164 = pneg %p118
      $region18: #{_forward_one.1} parent=11 // pred_check_branch
        %166 = sbr.rel (%p164) target = $region20
      $region19: #{_forward_one.1} parent=11 // pred_region
        _
      $region20: #{_forward_one.1} parent=11 // pred_fallthru
        _
    $region12: #{_forward_one.1} parent=5 // pred_fallthru
      _
    %p167 = scmp.lt.s32.totalorder %s10, 4
    // Predicated region
    $region21: #{_forward_one.1} parent=5 // pred_check
      %p168 = pneg %p167
    $region22: #{_forward_one.1} parent=5 // pred_check_branch
      %170 = sbr.rel (%p168) target = $region24
    $region23: #{_forward_one.1} parent=5 // pred_region
      // Predicated region
      $region25: #{_forward_one.1} parent=23 // pred_check
        %p171 = pneg %p44
      $region26: #{_forward_one.1} parent=23 // pred_check_branch
        %173 = sbr.rel (%p171) target = $region28
      $region27: #{_forward_one.1} parent=23 // pred_region
        %p174 = scmp.lt.s32.totalorder %s17, 1
        %s175 = scalar_select %p174, %s17, 1
        %p176 = scmp.lt.s32.totalorder %s18, 1
        %s177 = scalar_select %p176, %s18, 1
        %s178 = smul.addr %s175, 2
        %s179 = sadd.s32 %s177, %s178
        %s180 = smul.addr %s179, 2
        %s181 = scalar_lea.vmem %s0, %s180
      $region28: #{_forward_one.1} parent=23 // pred_fallthru
        _
      // Predicated region
      $region29: #{_forward_one.1} parent=23 // pred_check
        %p182 = pneg %p70
      $region30: #{_forward_one.1} parent=23 // pred_check_branch
        %184 = sbr.rel (%p182) target = $region32
      $region31: #{_forward_one.1} parent=23 // pred_region
        %p185 = scmp.lt.s32.totalorder %s17, 1
        %s186 = scalar_select %p185, %s17, 1
        %s187 = smul.addr %s186, 4
        %s188 = smul.addr %s187, 4
        %s189 = scalar_lea.vmem %s1, %s188
      $region32: #{_forward_one.1} parent=23 // pred_fallthru
        _
    $region24: #{_forward_one.1} parent=5 // pred_fallthru
      _
    %p190 = scmp.le.s32.totalorder 1, %s10
    %p191 = scmp.lt.s32.totalorder %s10, 5
    %p192 = pnand %p190, %p191
    %p193 = pneg %p192
    // Predicated region
    $region33: #{_forward_one.1} parent=5 // pred_check
      _
    $region34: #{_forward_one.1} parent=5 // pred_check_branch
      %195 = sbr.rel (%p192) target = $region36
    $region35: #{_forward_one.1} parent=5 // pred_region
      %s196 = ssub.s32 %s10, 1
      %p197 = scmp.lt.s32.totalorder %s19, 1
      %s198 = scalar_select %p197, %s19, 1
      %p199 = scmp.lt.s32.totalorder %s20, 1
      %s200 = scalar_select %p199, %s20, 1
      %s201 = smul.addr %s198, 2
      %s202 = sadd.s32 %s200, %s201
      %s203 = smul.addr %s202, 2
      %s204 = scalar_lea.vmem %s0, %s203
      %p205 = pneg %p50
      %p206 = pneg %p47
      %p207 = scmp.lt.s32.totalorder %s19, 1
      %s208 = scalar_select %p207, %s19, 1
      %s209 = smul.addr %s208, 4
      %s210 = smul.addr %s209, 4
      %s211 = scalar_lea.vmem %s1, %s210
      %p212 = pneg %p76
      %p213 = pneg %p73
      %p214 = pneg %p97
      %p215 = pneg %p94
      %p216 = pneg %p118
      %p217 = pneg %p115
      %p218 = pneg %p146
      %p219 = pneg %p143
      %p220 = scmp.lt.s32.totalorder %s19, 1
      %s221 = scalar_select %p220, %s19, 1
      %p222 = scmp.lt.s32.totalorder %s20, 1
      %s223 = scalar_select %p222, %s20, 1
      %s224 = smul.addr %s221, 2
      %s225 = sadd.s32 %s223, %s224
      %s226 = smul.addr %s225, 2
      %s227 = scalar_lea.vmem %s4, %s226
      %p228 = scmp.lt.s32.totalorder %s19, 1
      %s229 = scalar_select %p228, %s19, 1
      %p230 = scmp.lt.s32.totalorder %s20, 1
      %s231 = scalar_select %p230, %s20, 1
      %s232 = smul.addr %s229, 2
      %s233 = sadd.s32 %s231, %s232
      %s234 = smul.addr %s233, 2
      %s235 = scalar_lea.vmem %s0, %s234
      %p236 = scmp.lt.s32.totalorder %s19, 1
      %s237 = scalar_select %p236, %s19, 1
      %s238 = smul.addr %s237, 4
      %s239 = smul.addr %s238, 4
      %s240 = scalar_lea.vmem %s1, %s239
      %p241 = scmp.lt.s32.totalorder %s19, 1
      %s242 = scalar_select %p241, %s19, 1
      %p243 = scmp.lt.s32.totalorder %s20, 1
      %s244 = scalar_select %p243, %s20, 1
      %s245 = smul.addr %s242, 2
      %s246 = sadd.s32 %s244, %s245
      %s247 = smul.addr %s246, 2
      %s248 = scalar_lea.vmem %s4, %s247
      %v252 = vld [vmem:[%s235] sm:$0x3]
      %vm253 = vcmask 1041408
      %v256 = vsel %vm253, %v252, 1065369472
      %v257 = vld [vmem:[%s240] sm:$0xf]
      %v258 = vld [vmem:[%s240 + $0x4] sm:$0xf]
      %v259 = vld [vmem:[%s240 + $0x8] sm:$0xf]
      %v260 = vld [vmem:[%s240 + $0xc] sm:$0xf]
      %v265 = vunpack.c.l.b16 %v257
      %v266 = vunpack.c.l.b16 %v258
      %v267 = vunpack.c.l.b16 %v259
      %v268 = vunpack.c.l.b16 %v260
      %v269 = vpack.c.b16 %v266, %v265
      %v270 = vpack.c.b16 %v268, %v267
      %vm271 = vcmask 39936
      %v273 = vsel %vm271, %v269, 0
      %v276 = vsel %vm271, %v270, 0
      %vm278 = vcmask 1042432
      %v279 = vsel %vm253, 4294967295, 65535
      %v280 = vsel %vm278, %v279, 0
      %v281 = vand.u32 %v256, %v280
      %283 = vmatprep.subr.bf16.mxu0 0
      %284 = vmatpush1.bf16.msra.mxu0 %v281
      %285 = vmatprep.subr.bf16.mxu0 0
      %286 = vmatpush1.bf16.msra.mxu0 0
      %287 = vmatprep.subr.bf16.mxu0 0
      %288 = vmatpush1.bf16.msra.mxu0 0
      %289 = vmatprep.subr.bf16.mxu0 0
      %290 = vmatpush1.bf16.msra.mxu0 0
      %291 = vmatprep.subr.bf16.mxu0 0
      %292 = vmatpush1.bf16.msra.mxu0 0
      %293 = vmatprep.subr.bf16.mxu0 0
      %294 = vmatpush1.bf16.msra.mxu0 0
      %295 = vmatprep.subr.bf16.mxu0 0
      %296 = vmatpush1.bf16.msra.mxu0 0
      %297 = vmatprep.subr.bf16.mxu0 0
      %298 = vmatpush1.bf16.msra.mxu0 0
      %299 = vmatprep.subr.bf16.mxu0 0
      %300 = vmatpush1.bf16.msra.mxu0 0
      %301 = vmatprep.subr.bf16.mxu0 0
      %302 = vmatpush1.bf16.msra.mxu0 0
      %303 = vmatprep.subr.bf16.mxu0 0
      %304 = vmatpush1.bf16.msra.mxu0 0
      %305 = vmatprep.subr.bf16.mxu0 0
      %306 = vmatpush1.bf16.msra.mxu0 0
      %307 = vmatprep.subr.bf16.mxu0 0
      %308 = vmatpush1.bf16.msra.mxu0 0
      %309 = vmatprep.subr.bf16.mxu0 0
      %310 = vmatpush1.bf16.msra.mxu0 0
      %311 = vmatprep.subr.bf16.mxu0 0
      %312 = vmatpush1.bf16.msra.mxu0 0
      %313 = vmatprep.subr.bf16.mxu0 0
      %314 = vmatpush1.bf16.msra.mxu0 0
      %315 = vmatprep.mubr.bf16.mxu0 0
      %316 = vmatmul.mubr.bf16.gmra.mrb[0].mxu0 %v273
      %v317 = vpop.f32.mrb[0].mxu0
      %v318 = vadd.f32 0.0, %v317
      %v319 = vpop.f32.mrb[0].mxu0
      %v320 = vpop.f32.mrb[0].mxu0
      %v321 = vadd.f32 0.0, %v320
      %v322 = vpop.f32.mrb[0].mxu0
      %323 = vmatprep.mubr.bf16.mxu0 0
      %324 = vmatmul.mubr.bf16.gmra.mrb[0].mxu0 %v276
      %v325 = vpop.f32.mrb[0].mxu0
      %v326 = vadd.f32 0.0, %v325
      %v327 = vpop.f32.mrb[0].mxu0
      %v328 = vpop.f32.mrb[0].mxu0
      %v329 = vadd.f32 0.0, %v328
      %v330 = vpop.f32.mrb[0].mxu0
      %331 = vdwg.mxu0
      %v332 = vpack.c.bf16 %v321, %v318
      %v333 = vpack.c.bf16 %v329, %v326
      %v334 = vmul.bf16 %v332, 1056980736
      %v335 = vmul.bf16 %v333, 1056980736
      %v336 = vtanh.bf16.pop %v334
      %v337 = vtanh.bf16.pop %v335
      %v338 = vmul.bf16 %v336, 1056980736
      %v339 = vmul.bf16 %v337, 1056980736
      %v340 = vadd.bf16 %v338, 1056980736
      %v341 = vadd.bf16 %v339, 1056980736
      %v342 = vmul.bf16 %v332, %v340
      %v343 = vmul.bf16 %v333, %v341
      %v344 = vld [vmem:[%s2] sm:$0x3]
      %v345 = vld [vmem:[%s3] sm:$0xf]
      %347 = vset.pattern.permute.xlu0 0
      %348 = vperm.xlu0 %347, %v345
      %v349 = vpop.permute.xlu0 %348
      %vm351 = vcmask 261120
      %v353 = vsel %vm351, %v344, 0
      %355 = vmatprep.subr.bf16.mxu0 0
      %356 = vmatpush1.bf16.msra.mxu0 %v342
      %357 = vmatprep.subr.bf16.mxu0 0
      %358 = vmatpush1.bf16.msra.mxu0 %v343
      %359 = vmatprep.subr.bf16.mxu0 0
      %360 = vmatpush1.bf16.msra.mxu0 0
      %361 = vmatprep.subr.bf16.mxu0 0
      %362 = vmatpush1.bf16.msra.mxu0 0
      %363 = vmatprep.subr.bf16.mxu0 0
      %364 = vmatpush1.bf16.msra.mxu0 0
      %365 = vmatprep.subr.bf16.mxu0 0
      %366 = vmatpush1.bf16.msra.mxu0 0
      %367 = vmatprep.subr.bf16.mxu0 0
      %368 = vmatpush1.bf16.msra.mxu0 0
      %369 = vmatprep.subr.bf16.mxu0 0
      %370 = vmatpush1.bf16.msra.mxu0 0
      %371 = vmatprep.subr.bf16.mxu0 0
      %372 = vmatpush1.bf16.msra.mxu0 0
      %373 = vmatprep.subr.bf16.mxu0 0
      %374 = vmatpush1.bf16.msra.mxu0 0
      %375 = vmatprep.subr.bf16.mxu0 0
      %376 = vmatpush1.bf16.msra.mxu0 0
      %377 = vmatprep.subr.bf16.mxu0 0
      %378 = vmatpush1.bf16.msra.mxu0 0
      %379 = vmatprep.subr.bf16.mxu0 0
      %380 = vmatpush1.bf16.msra.mxu0 0
      %381 = vmatprep.subr.bf16.mxu0 0
      %382 = vmatpush1.bf16.msra.mxu0 0
      %383 = vmatprep.subr.bf16.mxu0 0
      %384 = vmatpush1.bf16.msra.mxu0 0
      %385 = vmatprep.subr.bf16.mxu0 0
      %386 = vmatpush1.bf16.msra.mxu0 0
      %387 = vmatprep.mubr.bf16.mxu0 0
      %388 = vmatmul.mubr.bf16.gmra.mrb[0].mxu0 %v353
      %v389 = vpop.f32.mrb[0].mxu0
      %v390 = vadd.f32 %v349, %v389
      %v391 = vpop.f32.mrb[0].mxu0
      %v392 = vpop.f32.mrb[0].mxu0
      %v393 = vpop.f32.mrb[0].mxu0
      %394 = vdwg.mxu0
      %v395 = vpack.c.bf16 %v390, %v390
      %396 = vst [vmem:[%s248] sm:$0x3] %v395
      %p397 = scmp.lt.s32.totalorder %s19, 1
      %s398 = scalar_select %p397, %s19, 1
      %p399 = scmp.lt.s32.totalorder %s20, 1
      %s400 = scalar_select %p399, %s20, 1
      %s401 = smul.addr %s398, 2
      %s402 = sadd.s32 %s400, %s401
      %s403 = smul.addr %s402, 2
      %s404 = scalar_lea.vmem %s4, %s403
      // Predicated region
      $region37: #{_forward_one.1} parent=35 // pred_check
        %p405 = pneg %p143
      $region38: #{_forward_one.1} parent=35 // pred_check_branch
        %407 = sbr.rel (%p405) target = $region40
      $region39: #{_forward_one.1} parent=35 // pred_region
        _
      $region40: #{_forward_one.1} parent=35 // pred_fallthru
        _
    $region36: #{_forward_one.1} parent=5 // pred_fallthru
      _
    %p408 = scmp.le.s32.totalorder 2, %s10
    // Predicated region
    $region41: #{_forward_one.1} parent=5 // pred_check
      %p409 = pneg %p408
    $region42: #{_forward_one.1} parent=5 // pred_check_branch
      %411 = sbr.rel (%p409) target = $region44
    $region43: #{_forward_one.1} parent=5 // pred_region
      %s412 = ssub.s32 %s10, 2
      // Predicated region
      $region45: #{_forward_one.1} parent=43 // pred_check
        %p413 = pneg %p149
      $region46: #{_forward_one.1} parent=43 // pred_check_branch
        %415 = sbr.rel (%p413) target = $region48
      $region47: #{_forward_one.1} parent=43 // pred_region
        %p416 = scmp.lt.s32.totalorder %s21, 1
        %s417 = scalar_select %p416, %s21, 1
        %p418 = scmp.lt.s32.totalorder %s22, 1
        %s419 = scalar_select %p418, %s22, 1
        %s420 = smul.addr %s417, 2
        %s421 = sadd.s32 %s419, %s420
        %s422 = smul.addr %s421, 2
        %s423 = scalar_lea.vmem %s4, %s422
      $region48: #{_forward_one.1} parent=43 // pred_fallthru
        _
    $region44: #{_forward_one.1} parent=5 // pred_fallthru
      _
  $region6: #{_forward_one.1} parent=0 // loop_footer
    %s14 = sadd.s32 1, %s10
  $region7: #{_forward_one.1} parent=0 // loop_footer_branch
    %9 = sbr.rel target = $region3
  $region8: #{_forward_one.1} parent=0 // loop_exit
    _

</llo_original>
